<compile_context>
chip_gen: v7x
topology: tpu7x:2x2x1
jax: 0.10.0
libtpu: 0.0.40
codegen_flags: <defaults>
</compile_context>

<pallas_src>
import functools

import jax
import jax.numpy as jnp
from jax.experimental import pallas as pl
from jax.experimental.pallas import tpu as pltpu


def _round_up(x, m):
    return ((x + m - 1) // m) * m


# ---------------------------------------------------------------------------
# Path A: weight-stationary. Weight/bias blocks are constant across the grid
# (resident in VMEM); only x and y stream. Single dot + bias + one store.
# ---------------------------------------------------------------------------
def _linear_ws_kernel(x_ref, w_ref, b_ref, o_ref):
    acc = jnp.dot(x_ref[...], w_ref[...], preferred_element_type=jnp.float32)
    o_ref[...] = (acc + b_ref[...].astype(jnp.float32)).astype(o_ref.dtype)


# ---------------------------------------------------------------------------
# Path B: tiled fallback for weights too large to keep resident.
# K is the innermost "arbitrary" axis; f32 VMEM accumulator; output (plus
# bias) written exactly once on the last K step.
# ---------------------------------------------------------------------------
def _linear_tiled_kernel(x_ref, w_ref, b_ref, o_ref, acc_ref):
    k = pl.program_id(2)

    @pl.when(k == 0)
    def _():
        acc_ref[...] = jnp.zeros_like(acc_ref)

    acc_ref[...] += jnp.dot(x_ref[...], w_ref[...],
                            preferred_element_type=jnp.float32)

    @pl.when(k == pl.num_programs(2) - 1)
    def _():
        o_ref[...] = (acc_ref[...] + b_ref[...].astype(jnp.float32)).astype(
            o_ref.dtype)


def prepare_params(weight, bias):
    """Run once at init: PyTorch Linear params (H,F),(H,) -> kernel layout
    (F,H),(1,H). Keeps the per-call jitted path free of the transpose."""
    w_t = jnp.asarray(weight).T            # (F, H)
    b2 = jnp.asarray(bias).reshape(1, -1)  # (1, H)
    return w_t, b2


@functools.partial(jax.jit, static_argnames=("tm_max",))
def vtb_user_encoder(features, w_t, b2, *, tm_max=512):
    """features: (..., F); w_t: (F, H) (pre-transposed); b2: (1, H)."""
    F = features.shape[-1]
    H = w_t.shape[1]
    lead = features.shape[:-1]
    out_dtype = features.dtype

    x2d = features.reshape(-1, F)
    M = x2d.shape[0]

    # Token-axis tile: multiple of 8, padded so every grid step is full.
    tm = min(tm_max, _round_up(M, 8))
    # Keep >= 2 steps on the parallel M axis when M is big enough (v7x has
    # 2 TensorCores; harmless ~0.35us extra step on v5e/v6e).
    if M > 8 and tm >= M:
        tm = _round_up((M + 1) // 2, 8)
    Mp = _round_up(M, tm)
    if Mp != M:
        x2d = jnp.pad(x2d, ((0, Mp - M), (0, 0)))

    # VMEM budget check (conservative for v7x: 32 MiB default scoped VMEM,
    # leave headroom). Assume 2x buffering on every block.
    in_bytes = jnp.dtype(x2d.dtype).itemsize
    w_bytes = F * H * jnp.dtype(w_t.dtype).itemsize
    footprint = (2 * w_bytes
                 + 2 * tm * F * in_bytes
                 + 2 * tm * H * jnp.dtype(out_dtype).itemsize
                 + 2 * H * jnp.dtype(b2.dtype).itemsize)
    weight_stationary = footprint <= 24 * 1024 * 1024

    if weight_stationary:
        out = pl.pallas_call(
            _linear_ws_kernel,
            out_shape=jax.ShapeDtypeStruct((Mp, H), out_dtype),
            grid_spec=pltpu.PrefetchScalarGridSpec(
                num_scalar_prefetch=0,
                grid=(Mp // tm,),
                in_specs=[
                    pl.BlockSpec((tm, F), lambda i: (i, 0)),   # streams
                    pl.BlockSpec((F, H), lambda i: (0, 0)),    # resident
                    pl.BlockSpec((1, H), lambda i: (0, 0)),    # resident
                ],
                out_specs=pl.BlockSpec((tm, H), lambda i: (i, 0)),
            ),
            compiler_params=pltpu.CompilerParams(
                dimension_semantics=("parallel",)),
        )(x2d, w_t, b2)
        out = out[:M]
    else:
        # Tiled fallback: pad H and F up to full tiles (never fall back to
        # full-dimension blocks).
        tn, tk = 256, 512
        Hp = _round_up(H, tn)
        Fp = _round_up(F, tk)
        if Fp != F:
            x2d = jnp.pad(x2d, ((0, 0), (0, Fp - F)))
        w_p = jnp.pad(w_t, ((0, Fp - F), (0, Hp - H))) if (Fp != F or Hp != H) else w_t
        b_p = jnp.pad(b2, ((0, 0), (0, Hp - H))) if Hp != H else b2

        out = pl.pallas_call(
            _linear_tiled_kernel,
            out_shape=jax.ShapeDtypeStruct((Mp, Hp), out_dtype),
            grid_spec=pltpu.PrefetchScalarGridSpec(
                num_scalar_prefetch=0,
                grid=(Mp // tm, Hp // tn, Fp // tk),
                in_specs=[
                    pl.BlockSpec((tm, tk), lambda i, j, k: (i, k)),
                    pl.BlockSpec((tk, tn), lambda i, j, k: (k, j)),
                    pl.BlockSpec((1, tn), lambda i, j, k: (0, j)),
                ],
                out_specs=pl.BlockSpec((tm, tn), lambda i, j, k: (i, j)),
                scratch_shapes=[pltpu.VMEM((tm, tn), jnp.float32)],
            ),
            compiler_params=pltpu.CompilerParams(
                dimension_semantics=("parallel", "parallel", "arbitrary")),
        )(x2d, w_p, b_p)
        out = out[:M, :H]

    return out.reshape(*lead, H)


def vtb_user_encoder_ref(features, weight, bias):
    """Plain-JAX reference mirroring the PyTorch forward (weight in (H, F))."""
    return jnp.einsum("...f,hf->...h", features, weight) + bias


if __name__ == "__main__":
    feature_num = 16
    hidden_dim = 32
    batch = 8

    key = jax.random.PRNGKey(0)
    k_x, k_w, k_b = jax.random.split(key, 3)

    # nn.Linear default init: U(-1/sqrt(fan_in), 1/sqrt(fan_in)).
    bound = 1.0 / (feature_num ** 0.5)
    weight = jax.random.uniform(
        k_w, (hidden_dim, feature_num), jnp.float32, -bound, bound)
    bias = jax.random.uniform(
        k_b, (hidden_dim,), jnp.float32, -bound, bound)
    features = jax.random.normal(k_x, (batch, feature_num), jnp.float32)

    # Init-time param prep (transpose happens once, outside the hot path).
    w_t, b2 = prepare_params(weight, bias)

    out = vtb_user_encoder(features, w_t, b2)
    out = jax.block_until_ready(out)

    ref = vtb_user_encoder_ref(features, weight, bias)
    assert out.shape == (batch, hidden_dim)
    assert out.dtype == features.dtype
    assert jnp.allclose(out, ref, atol=1e-5, rtol=1e-5)
    print("KERNEL_OK")
</pallas_src>

<mosaic_0001>
module attributes {stable_mosaic.version = 11 : i64} {
  func.func @_linear_ws_kernel(%arg0: i32, %arg1: memref<8x16xf32, #tpu.memory_space<vmem>>, %arg2: memref<16x32xf32, #tpu.memory_space<vmem>>, %arg3: memref<1x32xf32, #tpu.memory_space<vmem>>, %arg4: memref<8x32xf32, #tpu.memory_space<vmem>>) attributes {dimension_semantics = [#tpu.dimension_semantics<parallel>], iteration_bounds = array<i64: 1>, scalar_prefetch = 0 : i64, scratch_operands = 0 : i64, tpu.core_type = #tpu.core_type<tc>, window_params = [{transform_indices = @transform_0, window_bounds = array<i64: 8, 16>}, {pipeline_mode = #tpu.pipeline_mode<synchronous>, transform_indices = @transform_1, window_bounds = array<i64: 16, 32>}, {pipeline_mode = #tpu.pipeline_mode<synchronous>, transform_indices = @transform_2, window_bounds = array<i64: 1, 32>}, {transform_indices = @transform_3, window_bounds = array<i64: 8, 32>}]} {
    %c0 = arith.constant 0 : index
    %c0_0 = arith.constant 0 : index
    %0 = vector.load %arg1[%c0, %c0_0] : memref<8x16xf32, #tpu.memory_space<vmem>>, vector<8x16xf32>
    %c0_1 = arith.constant 0 : index
    %c0_2 = arith.constant 0 : index
    %1 = vector.load %arg2[%c0_1, %c0_2] : memref<16x32xf32, #tpu.memory_space<vmem>>, vector<16x32xf32>
    %cst = arith.constant dense<0.000000e+00> : vector<8x32xf32>
    %2 = tpu.matmul %0, %1, %cst {dimension_numbers = #tpu.dot_dimension_numbers<[1], [0], [0], [1], [0, 0, 1, 1], [], []>} : vector<8x16xf32>, vector<16x32xf32>, vector<8x32xf32> -> vector<8x32xf32>
    %c0_3 = arith.constant 0 : index
    %c0_4 = arith.constant 0 : index
    %3 = vector.load %arg3[%c0_3, %c0_4] : memref<1x32xf32, #tpu.memory_space<vmem>>, vector<1x32xf32>
    %4 = vector.broadcast %3 : vector<1x32xf32> to vector<8x32xf32>
    %5 = arith.addf %2, %4 : vector<8x32xf32>
    %c0_5 = arith.constant 0 : index
    %c0_6 = arith.constant 0 : index
    %6 = vector.load %arg4[%c0_5, %c0_6] : memref<8x32xf32, #tpu.memory_space<vmem>>, vector<8x32xf32>
    tpu.vector_store %arg4[%c0_5, %c0_6], %5 {strides = array<i32>} : memref<8x32xf32, #tpu.memory_space<vmem>>, vector<8x32xf32>,
    return
  }
  func.func @transform_0(%arg0: i32) -> (i32, i32) {
    %c0_i32 = arith.constant 0 : i32
    %c0_i32_0 = arith.constant 0 : i32
    return %arg0, %c0_i32 : i32, i32
  }
  func.func @transform_1(%arg0: i32) -> (i32, i32) {
    %c0_i32 = arith.constant 0 : i32
    %c0_i32_0 = arith.constant 0 : i32
    %c0_i32_1 = arith.constant 0 : i32
    return %c0_i32, %c0_i32_0 : i32, i32
  }
  func.func @transform_2(%arg0: i32) -> (i32, i32) {
    %c0_i32 = arith.constant 0 : i32
    %c0_i32_0 = arith.constant 0 : i32
    %c0_i32_1 = arith.constant 0 : i32
    return %c0_i32, %c0_i32_0 : i32, i32
  }
  func.func @transform_3(%arg0: i32) -> (i32, i32) {
    %c0_i32 = arith.constant 0 : i32
    %c0_i32_0 = arith.constant 0 : i32
    return %arg0, %c0_i32 : i32, i32
  }
}

</mosaic_0001>

<llo_original>
// kernel: vtb_user_encoder.1
$region0: #{vtb_user_encoder.1}
  #allocation0 [shape = 'u32[]', space=smem, size = 0x4, offset = 0x4, fixed_abs, tag = 'smem constant byte address 0x4 - core index']
  #allocation1 [shape = 'u32[144,128]{1,0:T(1,128)}', space=vmem, size = 0x12000, scoped, tag = 'internal scratch']
  %s0 = inlined_call_operand.hbm [shape: f32[8,16], index: 0, kind: input, shape index: {}]
  %s1 = inlined_call_operand.hbm [shape: f32[16,32], index: 1, kind: input, shape index: {}]
  %s2 = inlined_call_operand.vmem [shape: f32[1,32], index: 2, kind: input, shape index: {}]
  %s3 = inlined_call_operand.hbm [shape: f32[8,32], index: 3, kind: output, shape index: {}]
  %s4 = sld [smem:[#allocation0]]
  $region30: #{vtb_user_encoder.1} parent=0
    _
  %s6 = ssub.s32 1, %s4
  %s7 = scalar_select 0, %s6, %s4
  $region1: #{vtb_user_encoder.1} parent=0
    #allocation2 [shape = 'u8[4096]{0}', space=vmem, size = 0x1000, scoped, tag = 'input window, operand 0, single buffered']
    #allocation3 [shape = 's32[1]{0}', space=sflag, size = 0x4, scoped, tag = 'scoped memory for vtb_user_encoder.1']
    #allocation4 [shape = 's32[1]{0}', space=sflag, size = 0x4, scoped, tag = 'scoped memory for vtb_user_encoder.1']
    #allocation5 [shape = 'u8[8192]{0}', space=vmem, size = 0x2000, scoped, tag = 'input window, operand 1, single buffered']
    #allocation6 [shape = 's32[1]{0}', space=sflag, size = 0x4, scoped, tag = 'scoped memory for vtb_user_encoder.1']
    #allocation7 [shape = 'u8[4096]{0}', space=vmem, size = 0x1000, scoped, tag = 'output window, operand 0, single buffered']
    %8 = vsyncpa [#allocation3], 0
    %9 = vsyncpa [#allocation6], 0
    %10 = vsyncpa [#allocation4], 0
    // Predicated region
    $region2: #{vtb_user_encoder.1} parent=1 // pred_check
      _
    $region3: #{vtb_user_encoder.1} parent=1 // pred_check_branch
      %12 = sbr.rel (0) target = $region5
    $region4: #{vtb_user_encoder.1} parent=1 // pred_region
      %s14 = ssub.s32 128, 128
      %15 = vsyncadd [#allocation3], %s14
      %s17 = sshll.u32 [#allocation2], 4
      %s18 = int_to_ptr.vmem [resolvable:$true] %s17
      %20 = dma.hbm_to_vmem [thread:$0]  %s0, 128, %s18, [#allocation3]
    $region5: #{vtb_user_encoder.1} parent=1 // pred_fallthru
      _
    // Predicated region
    $region6: #{vtb_user_encoder.1} parent=1 // pred_check
      _
    $region7: #{vtb_user_encoder.1} parent=1 // pred_check_branch
      %22 = sbr.rel (0) target = $region9
    $region8: #{vtb_user_encoder.1} parent=1 // pred_region
      %s24 = ssub.s32 256, 256
      %25 = vsyncadd [#allocation6], %s24
      %s26 = sshll.u32 [#allocation5], 4
      %s27 = int_to_ptr.vmem [resolvable:$true] %s26
      %32 = dma.hbm_to_vmem [thread:$0]  %s1, 256, %s27, [#allocation6], 128, 128, 8
    $region9: #{vtb_user_encoder.1} parent=1 // pred_fallthru
      _
    // Predicated region
    $region10: #{vtb_user_encoder.1} parent=1 // pred_check
      _
    $region11: #{vtb_user_encoder.1} parent=1 // pred_check_branch
      %34 = sbr.rel (0) target = $region13
    $region12: #{vtb_user_encoder.1} parent=1 // pred_region
      _
    $region13: #{vtb_user_encoder.1} parent=1 // pred_fallthru
      _
    // Predicated region
    $region14: #{vtb_user_encoder.1} parent=1 // pred_check
      _
    $region15: #{vtb_user_encoder.1} parent=1 // pred_check_branch
      %36 = sbr.rel (0) target = $region17
    $region16: #{vtb_user_encoder.1} parent=1 // pred_region
      %37 = dma.done [#allocation3], 128
    $region17: #{vtb_user_encoder.1} parent=1 // pred_fallthru
      _
    // Predicated region
    $region18: #{vtb_user_encoder.1} parent=1 // pred_check
      _
    $region19: #{vtb_user_encoder.1} parent=1 // pred_check_branch
      %39 = sbr.rel (0) target = $region21
    $region20: #{vtb_user_encoder.1} parent=1 // pred_region
      %40 = dma.done [#allocation6], 256
    $region21: #{vtb_user_encoder.1} parent=1 // pred_fallthru
      _
    %v41 = vld [vmem:[#allocation2] sm:$0xff]
    %v42 = vld [vmem:[#allocation5] sm:$0xff]
    %v43 = vld [vmem:[#allocation5 + $0x8] sm:$0xff]
    %v44 = vld [vmem:[%s2] sm:$0x1]
    %v46 = vlaneseq
    %v47 = vshrl.u32 %v46, 7
    %v48 = vsub.s32 0, %v47
    %v49 = vrot.slane %v44, %v48
    %vm51 = vcmask 130048
    %v53 = vsel %vm51, %v41, 0
    %55 = vmatprep.subr.mxu0 0.0
    %56 = vmatpush1.msra.mxu0 %v42
    %57 = vmatprep.subr.mxu0 0.0
    %58 = vmatpush1.msra.mxu0 %v43
    %59 = vmatprep.subr.mxu0 0.0
    %60 = vmatpush1.msra.mxu0 0.0
    %61 = vmatprep.subr.mxu0 0.0
    %62 = vmatpush1.msra.mxu0 0.0
    %63 = vmatprep.subr.mxu0 0.0
    %64 = vmatpush1.msra.mxu0 0.0
    %65 = vmatprep.subr.mxu0 0.0
    %66 = vmatpush1.msra.mxu0 0.0
    %67 = vmatprep.subr.mxu0 0.0
    %68 = vmatpush1.msra.mxu0 0.0
    %69 = vmatprep.subr.mxu0 0.0
    %70 = vmatpush1.msra.mxu0 0.0
    %71 = vmatprep.subr.mxu0 0.0
    %72 = vmatpush1.msra.mxu0 0.0
    %73 = vmatprep.subr.mxu0 0.0
    %74 = vmatpush1.msra.mxu0 0.0
    %75 = vmatprep.subr.mxu0 0.0
    %76 = vmatpush1.msra.mxu0 0.0
    %77 = vmatprep.subr.mxu0 0.0
    %78 = vmatpush1.msra.mxu0 0.0
    %79 = vmatprep.subr.mxu0 0.0
    %80 = vmatpush1.msra.mxu0 0.0
    %81 = vmatprep.subr.mxu0 0.0
    %82 = vmatpush1.msra.mxu0 0.0
    %83 = vmatprep.subr.mxu0 0.0
    %84 = vmatpush1.msra.mxu0 0.0
    %85 = vmatprep.subr.mxu0 0.0
    %86 = vmatpush1.msra.mxu0 0.0
    %87 = vmatprep.subr.mxu0 0.0
    %88 = vmatpush1.msra.mxu0 0.0
    %89 = vmatprep.subr.mxu0 0.0
    %90 = vmatpush1.msra.mxu0 0.0
    %91 = vmatprep.subr.mxu0 0.0
    %92 = vmatpush1.msra.mxu0 0.0
    %93 = vmatprep.subr.mxu0 0.0
    %94 = vmatpush1.msra.mxu0 0.0
    %95 = vmatprep.subr.mxu0 0.0
    %96 = vmatpush1.msra.mxu0 0.0
    %97 = vmatprep.subr.mxu0 0.0
    %98 = vmatpush1.msra.mxu0 0.0
    %99 = vmatprep.subr.mxu0 0.0
    %100 = vmatpush1.msra.mxu0 0.0
    %101 = vmatprep.subr.mxu0 0.0
    %102 = vmatpush1.msra.mxu0 0.0
    %103 = vmatprep.subr.mxu0 0.0
    %104 = vmatpush1.msra.mxu0 0.0
    %105 = vmatprep.subr.mxu0 0.0
    %106 = vmatpush1.msra.mxu0 0.0
    %107 = vmatprep.subr.mxu0 0.0
    %108 = vmatpush1.msra.mxu0 0.0
    %109 = vmatprep.subr.mxu0 0.0
    %110 = vmatpush1.msra.mxu0 0.0
    %111 = vmatprep.subr.mxu0 0.0
    %112 = vmatpush1.msra.mxu0 0.0
    %113 = vmatprep.subr.mxu0 0.0
    %114 = vmatpush1.msra.mxu0 0.0
    %115 = vmatprep.subr.mxu0 0.0
    %116 = vmatpush1.msra.mxu0 0.0
    %117 = vmatprep.subr.mxu0 0.0
    %118 = vmatpush1.msra.mxu0 0.0
    %119 = vmatprep.mubr.f32.mxu0 0.0
    %120 = vmatmul.mubr.f32.gmra.mrb[0].mxu0 %v53
    %v121 = vpop.f32.mrb[0].mxu0
    %v122 = vadd.f32 %v49, %v121
    %v123 = vpop.f32.mrb[0].mxu0
    %124 = vdwg.mxu0
    %vm125 = vcmask 261120
    %126 = vst.msk [vmem:[#allocation7] sm:$0xff] %vm125, %v122
    // Predicated region
    $region22: #{vtb_user_encoder.1} parent=1 // pred_check
      _
    $region23: #{vtb_user_encoder.1} parent=1 // pred_check_branch
      %128 = sbr.rel (0) target = $region25
    $region24: #{vtb_user_encoder.1} parent=1 // pred_region
      %s130 = ssub.s32 128, 128
      %131 = vsyncadd [#allocation4], %s130
      %s133 = sshll.u32 [#allocation7], 4
      %s134 = int_to_ptr.vmem [resolvable:$true] %s133
      %136 = dma.vmem_to_hbm [thread:$0]  %s134, 128, %s3, [#allocation4]
    $region25: #{vtb_user_encoder.1} parent=1 // pred_fallthru
      _
    // Predicated region
    $region26: #{vtb_user_encoder.1} parent=1 // pred_check
      _
    $region27: #{vtb_user_encoder.1} parent=1 // pred_check_branch
      %138 = sbr.rel (0) target = $region29
    $region28: #{vtb_user_encoder.1} parent=1 // pred_region
      %139 = dma.done [#allocation4], 128
    $region29: #{vtb_user_encoder.1} parent=1 // pred_fallthru
      _
    %140 = vsyncpa [#allocation3], 1
    %141 = vsyncpa [#allocation6], 1
    %142 = vsyncpa [#allocation4], 1

</llo_original>
